<compile_context>
chip_gen: v5e
topology: v5e:2x2
jax: 0.10.0
libtpu: 0.0.40
codegen_flags: <defaults>
</compile_context>

<pallas_src>
import functools

import jax
import jax.numpy as jnp
from jax import lax
from jax.experimental import pallas as pl
from jax.experimental.pallas import tpu as pltpu


def _round_up(x, m):
    return ((x + m - 1) // m) * m


def _int_pow(x, p):
    """x ** p for a small non-negative integer p, as plain VPU multiplies."""
    result = None
    base = x
    e = int(p)
    while e > 0:
        if e & 1:
            result = base if result is None else result * base
        e >>= 1
        if e:
            base = base * base
    return jnp.ones_like(x) if result is None else result


def _focal_loss_kernel(x_ref, t_ref, w_ref, out_ref, *, gamma, n_total):
    # x_ref: [TN, C] logits tile, t_ref: [TN, 1] int32 labels,
    # w_ref: [1, C] class weights, out_ref: [1, 1, 1] per-block partial sum.
    i = pl.program_id(0)
    x = x_ref[...].astype(jnp.float32)            # [TN, C]
    t = t_ref[...]                                # [TN, 1] int32
    w = w_ref[...].astype(jnp.float32)            # [1, C]
    tn, c = x.shape

    # Valid-row mask for the (possibly padded) last block.
    row_ids = i * tn + lax.broadcasted_iota(jnp.int32, (tn, 1), 0)   # [TN, 1]
    valid = row_ids < n_total                                        # [TN, 1]

    # One-hot gather of the target class (avoids dynamic gather on TPU).
    # TODO(synk): out-of-range targets contribute 0 (no ignore_index semantics).
    col_ids = lax.broadcasted_iota(jnp.int32, (tn, c), 1)            # [TN, C]
    onehot = (col_ids == t).astype(jnp.float32)                      # [TN, C]

    # Reduced softmax statistics -- no full softmax / log_softmax arrays.
    m = jnp.max(x, axis=1, keepdims=True)                            # [TN, 1]
    sum_exp = jnp.sum(jnp.exp(x - m), axis=1, keepdims=True)         # [TN, 1]
    x_t = jnp.sum(onehot * x, axis=1, keepdims=True)                 # [TN, 1]
    w_t = jnp.sum(onehot * w, axis=1, keepdims=True)                 # [TN, 1]

    log_p_t = x_t - m - jnp.log(sum_exp)                             # [TN, 1]
    p_t = jnp.exp(log_p_t)                                           # [TN, 1]

    ce = -w_t * log_p_t                                              # [TN, 1]
    if float(gamma) == int(gamma) and int(gamma) >= 0:
        focal = _int_pow(1.0 - p_t, int(gamma))                      # VPU muls
    else:
        focal = (1.0 - p_t) ** gamma
    loss = ce * focal                                                # [TN, 1]

    # Drop padded rows (where() also discards any garbage/NaN from padding).
    loss = jnp.where(valid, loss, 0.0)

    # Per-block partial sum; final mean (divide by true N) happens outside.
    out_ref[...] = jnp.sum(loss) * jnp.ones((1, 1, 1), jnp.float32)


def focal_loss(logits, target, weight, gamma=2, block_rows=None):
    """logits: [N, C] (any float dtype), target: [N] int, weight: [C].

    Returns the scalar mean focal loss (f32)."""
    n, c = logits.shape
    t2 = target.reshape(n, 1).astype(jnp.int32)
    w2 = weight.reshape(1, c).astype(jnp.float32)

    if block_rows is None:
        # Keep <= ~4 MiB per logits buffer (x2 for double-buffering) so the
        # working set fits comfortably inside the scoped-VMEM defaults on
        # v5e (16 MiB) / v6e (32 MiB) / v7x (32 MiB of 64 MiB physical).
        itemsize = jnp.dtype(logits.dtype).itemsize
        cap = (4 * 1024 * 1024) // max(1, c * itemsize)
        cap = max(8, (cap // 8) * 8)
        block_rows = min(cap, 1024, _round_up(n, 8))
    tn = block_rows
    num_blocks = pl.cdiv(n, tn)

    partials = pl.pallas_call(
        functools.partial(_focal_loss_kernel, gamma=gamma, n_total=n),
        out_shape=jax.ShapeDtypeStruct((num_blocks, 1, 1), jnp.float32),
        grid=(num_blocks,),
        in_specs=[
            pl.BlockSpec((tn, c), lambda i: (i, 0)),   # logits tile (orig dtype)
            pl.BlockSpec((tn, 1), lambda i: (i, 0)),   # targets tile
            pl.BlockSpec((1, c), lambda i: (0, 0)),    # class weights (resident)
        ],
        out_specs=pl.BlockSpec((1, 1, 1), lambda i: (i, 0, 0)),
        compiler_params=pltpu.CompilerParams(
            dimension_semantics=("parallel",),          # megacore on v7x
            vmem_limit_bytes=32 * 1024 * 1024,
        ),
    )(logits, t2, w2)

    # Tiny final reduction / mean in XLA; divisor is the true N.
    return jnp.sum(partials) / jnp.float32(n)


def _focal_loss_ref(logits, target, weight, gamma=2):
    """Pure-JAX reference mirroring the PyTorch forward."""
    logits = logits.astype(jnp.float32)
    logp = jax.nn.log_softmax(logits, axis=1)
    sm = jax.nn.softmax(logits, axis=1)
    log_p_t = jnp.take_along_axis(logp, target[:, None], axis=1)[:, 0]
    p_t = jnp.take_along_axis(sm, target[:, None], axis=1)[:, 0]
    w_t = weight[target]
    ce = -w_t * log_p_t
    return jnp.mean(ce * (1.0 - p_t) ** gamma)


if __name__ == "__main__":
    key = jax.random.PRNGKey(0)
    k1, k2, k3 = jax.random.split(key, 3)

    N, C = 8, 32  # small batch of logits over 32 classes
    logits = jax.random.normal(k1, (N, C), dtype=jnp.float32)
    target = jax.random.randint(k2, (N,), 0, C, dtype=jnp.int32)
    # Deterministic synthetic class weights (module ctor takes `weight`).
    weight = jax.random.uniform(k3, (C,), dtype=jnp.float32, minval=0.5, maxval=1.5)
    gamma = 2

    out = focal_loss(logits, target, weight, gamma=gamma)
    out = jax.block_until_ready(out)

    ref = _focal_loss_ref(logits, target, weight, gamma=gamma)
    assert jnp.allclose(out, ref, rtol=1e-5, atol=1e-5), (out, ref)

    print("KERNEL_OK")
</pallas_src>

<mosaic_0001>
module attributes {stable_mosaic.version = 11 : i64} {
  func.func @_focal_loss_kernel(%arg0: i32, %arg1: memref<8x32xf32, #tpu.memory_space<vmem>>, %arg2: memref<8x1xi32, #tpu.memory_space<vmem>>, %arg3: memref<1x32xf32, #tpu.memory_space<vmem>>, %arg4: memref<1x1x1xf32, #tpu.memory_space<vmem>>) attributes {dimension_semantics = [#tpu.dimension_semantics<parallel>], iteration_bounds = array<i64: 1>, scalar_prefetch = 0 : i64, scratch_operands = 0 : i64, tpu.core_type = #tpu.core_type<tc>, window_params = [{transform_indices = @transform_0, window_bounds = array<i64: 8, 32>}, {transform_indices = @transform_1, window_bounds = array<i64: 8, 1>}, {pipeline_mode = #tpu.pipeline_mode<synchronous>, transform_indices = @transform_2, window_bounds = array<i64: 1, 32>}, {transform_indices = @transform_3, window_bounds = array<i64: 1, 1, 1>}]} {
    %c0 = arith.constant 0 : index
    %c0_0 = arith.constant 0 : index
    %0 = vector.load %arg1[%c0, %c0_0] : memref<8x32xf32, #tpu.memory_space<vmem>>, vector<8x32xf32>
    %c0_1 = arith.constant 0 : index
    %c0_2 = arith.constant 0 : index
    %1 = vector.load %arg2[%c0_1, %c0_2] : memref<8x1xi32, #tpu.memory_space<vmem>>, vector<8x1xi32>
    %c0_3 = arith.constant 0 : index
    %c0_4 = arith.constant 0 : index
    %2 = vector.load %arg3[%c0_3, %c0_4] : memref<1x32xf32, #tpu.memory_space<vmem>>, vector<1x32xf32>
    %c8_i32 = arith.constant 8 : i32
    %3 = arith.muli %arg0, %c8_i32 : i32
    %4 = tpu.iota {dimensions = array<i32: 0>} : vector<8x1xi32>
    %5 = vector.broadcast %3 : i32 to vector<8x1xi32>
    %6 = arith.addi %5, %4 : vector<8x1xi32>
    %c8_i32_5 = arith.constant 8 : i32
    %7 = vector.broadcast %c8_i32_5 : i32 to vector<8x1xi32>
    %8 = arith.cmpi slt, %6, %7 : vector<8x1xi32>
    %9 = tpu.iota {dimensions = array<i32: 1>} : vector<8x32xi32>
    %10 = vector.broadcast %1 : vector<8x1xi32> to vector<8x32xi32>
    %11 = arith.cmpi eq, %9, %10 : vector<8x32xi32>
    %12 = arith.extui %11 : vector<8x32xi1> to vector<8x32xi32>
    %13 = arith.sitofp %12 : vector<8x32xi32> to vector<8x32xf32>
    %cst = arith.constant dense<0xFF800000> : vector<8xf32>
    %14 = vector.multi_reduction <maximumf>, %0, %cst [1] : vector<8x32xf32> to vector<8xf32>
    %15 = vector.shape_cast %14 : vector<8xf32> to vector<8x1xf32>
    %16 = vector.broadcast %15 : vector<8x1xf32> to vector<8x32xf32>
    %17 = arith.subf %0, %16 : vector<8x32xf32>
    %18 = math.exp %17 : vector<8x32xf32>
    %cst_6 = arith.constant dense<0.000000e+00> : vector<8xf32>
    %19 = vector.multi_reduction <add>, %18, %cst_6 [1] : vector<8x32xf32> to vector<8xf32>
    %20 = vector.shape_cast %19 : vector<8xf32> to vector<8x1xf32>
    %21 = arith.mulf %13, %0 : vector<8x32xf32>
    %cst_7 = arith.constant dense<0.000000e+00> : vector<8xf32>
    %22 = vector.multi_reduction <add>, %21, %cst_7 [1] : vector<8x32xf32> to vector<8xf32>
    %23 = vector.shape_cast %22 : vector<8xf32> to vector<8x1xf32>
    %24 = vector.broadcast %2 : vector<1x32xf32> to vector<8x32xf32>
    %25 = arith.mulf %13, %24 : vector<8x32xf32>
    %cst_8 = arith.constant dense<0.000000e+00> : vector<8xf32>
    %26 = vector.multi_reduction <add>, %25, %cst_8 [1] : vector<8x32xf32> to vector<8xf32>
    %27 = vector.shape_cast %26 : vector<8xf32> to vector<8x1xf32>
    %28 = arith.subf %23, %15 : vector<8x1xf32>
    %29 = math.log %20 : vector<8x1xf32>
    %30 = arith.subf %28, %29 : vector<8x1xf32>
    %31 = math.exp %30 : vector<8x1xf32>
    %cst_9 = arith.constant 0.000000e+00 : f32
    %32 = vector.broadcast %cst_9 : f32 to vector<8x1xf32>
    %33 = arith.subf %32, %27 : vector<8x1xf32>
    %34 = arith.mulf %33, %30 : vector<8x1xf32>
    %cst_10 = arith.constant 1.000000e+00 : f32
    %35 = vector.broadcast %cst_10 : f32 to vector<8x1xf32>
    %36 = arith.subf %35, %31 : vector<8x1xf32>
    %37 = arith.mulf %36, %36 : vector<8x1xf32>
    %38 = arith.mulf %34, %37 : vector<8x1xf32>
    %cst_11 = arith.constant 0.000000e+00 : f32
    %39 = vector.broadcast %cst_11 : f32 to vector<8x1xf32>
    %40 = arith.select %8, %38, %39 : vector<8x1xi1>, vector<8x1xf32>
    %41 = vector.shape_cast %40 : vector<8x1xf32> to vector<1x8x1xf32>
    %cst_12 = arith.constant dense<0.000000e+00> : vector<1xf32>
    %42 = vector.multi_reduction <add>, %41, %cst_12 [1, 2] : vector<1x8x1xf32> to vector<1xf32>
    %43 = vector.shape_cast %42 : vector<1xf32> to vector<1x1x1xf32>
    %44 = vector.extract %43[0, 0, 0] : f32 from vector<1x1x1xf32>
    %cst_13 = arith.constant 1.000000e+00 : f32
    %45 = vector.broadcast %cst_13 : f32 to vector<1x1x1xf32>
    %46 = vector.broadcast %44 : f32 to vector<1x1x1xf32>
    %47 = arith.mulf %46, %45 : vector<1x1x1xf32>
    %c0_14 = arith.constant 0 : index
    %c0_15 = arith.constant 0 : index
    %c0_16 = arith.constant 0 : index
    %48 = vector.load %arg4[%c0_14, %c0_15, %c0_16] : memref<1x1x1xf32, #tpu.memory_space<vmem>>, vector<1x1x1xf32>
    tpu.vector_store %arg4[%c0_14, %c0_15, %c0_16], %47 {strides = array<i32>} : memref<1x1x1xf32, #tpu.memory_space<vmem>>, vector<1x1x1xf32>,
    return
  }
  func.func @transform_0(%arg0: i32) -> (i32, i32) {
    %c0_i32 = arith.constant 0 : i32
    %c0_i32_0 = arith.constant 0 : i32
    return %arg0, %c0_i32 : i32, i32
  }
  func.func @transform_1(%arg0: i32) -> (i32, i32) {
    %c0_i32 = arith.constant 0 : i32
    %c0_i32_0 = arith.constant 0 : i32
    return %arg0, %c0_i32 : i32, i32
  }
  func.func @transform_2(%arg0: i32) -> (i32, i32) {
    %c0_i32 = arith.constant 0 : i32
    %c0_i32_0 = arith.constant 0 : i32
    %c0_i32_1 = arith.constant 0 : i32
    return %c0_i32, %c0_i32_0 : i32, i32
  }
  func.func @transform_3(%arg0: i32) -> (i32, i32, i32) {
    %c0_i32 = arith.constant 0 : i32
    %c0_i32_0 = arith.constant 0 : i32
    %c0_i32_1 = arith.constant 0 : i32
    return %arg0, %c0_i32, %c0_i32_0 : i32, i32, i32
  }
}

</mosaic_0001>

<llo_original>
// kernel: tpu_custom_call.1
$region0: #{tpu_custom_call.1}
  #allocation0 [shape = 'u32[]', space=smem, size = 0x4, offset = 0x4, fixed_abs, tag = 'smem constant byte address 0x4 - core index']
  #allocation1 [shape = 'u32[72,128]{1,0:T(1,128)}', space=vmem, size = 0x9000, scoped, tag = 'internal scratch']
  %s0 = inlined_call_operand.vmem [shape: f32[8,32], index: 0, kind: input, shape index: {}]
  %s1 = inlined_call_operand.vmem [shape: s32[8,1], index: 1, kind: input, shape index: {}]
  %s2 = inlined_call_operand.vmem [shape: f32[1,32], index: 2, kind: input, shape index: {}]
  %s3 = inlined_call_operand.hbm [shape: f32[1,1,1], index: 3, kind: output, shape index: {}]
  %s4 = sld [smem:[#allocation0]]
  $region22: #{tpu_custom_call.1} parent=0
    _
  %s6 = ssub.s32 1, %s4
  %s7 = scalar_select 0, %s6, %s4
  $region1: #{tpu_custom_call.1} parent=0
    #allocation2 [shape = 'u8[512]{0}', space=vmem, size = 0x400, scoped, tag = 'output window, operand 0, single buffered']
    #allocation3 [shape = 's32[1]{0}', space=sflag, size = 0x4, scoped, tag = 'scoped memory for tpu_custom_call.1']
    %8 = vsyncpa [#allocation3], 0
    // Predicated region
    $region2: #{tpu_custom_call.1} parent=1 // pred_check
      _
    $region3: #{tpu_custom_call.1} parent=1 // pred_check_branch
      %10 = sbr.rel (0) target = $region5
    $region4: #{tpu_custom_call.1} parent=1 // pred_region
      _
    $region5: #{tpu_custom_call.1} parent=1 // pred_fallthru
      _
    // Predicated region
    $region6: #{tpu_custom_call.1} parent=1 // pred_check
      _
    $region7: #{tpu_custom_call.1} parent=1 // pred_check_branch
      %12 = sbr.rel (0) target = $region9
    $region8: #{tpu_custom_call.1} parent=1 // pred_region
      _
    $region9: #{tpu_custom_call.1} parent=1 // pred_fallthru
      _
    // Predicated region
    $region10: #{tpu_custom_call.1} parent=1 // pred_check
      _
    $region11: #{tpu_custom_call.1} parent=1 // pred_check_branch
      %14 = sbr.rel (0) target = $region13
    $region12: #{tpu_custom_call.1} parent=1 // pred_region
      _
    $region13: #{tpu_custom_call.1} parent=1 // pred_fallthru
      _
    %v15 = vld [vmem:[%s0] sm:$0xff]
    %v16 = vld [vmem:[%s1] sm:$0xff]
    %v17 = vld [vmem:[%s2] sm:$0x1]
    %s18 = smul.u32 0, 8
    %v19 = vlaneseq
    %v20 = vshrl.u32 %v19, 7
    %v21 = vstv %s18
    %v22 = vadd.s32 %v21, %v20
    %vm23 = vcmp.lt.s32.totalorder %v22, 8
    %v24 = vlaneseq
    %v25 = vand.u32 %v24, 127
    %26 = vset.pattern.permute.xlu0 0
    %27 = vperm.xlu0 %26, %v16
    %v28 = vpop.permute.xlu0 %27
    %vm29 = vcmp.eq.s32.totalorder %v25, %v28
    %v30 = vsel %vm29, 1, 0
    %v31 = vcvt.s32.f32 %v30
    %vm32 = vcmask 261120
    %v33 = vsel %vm32, %v15, -inf
    %34 = vmax.xlane.f32.xlu0 %v33
    %v35 = vpop.xlane.xlu0 %34
    %v36 = vsub.f32 %v15, %v35
    %v37 = vmul.f32 %v36, 1.442695
    %v38 = vpow.pop %v37
    %v39 = vsel %vm32, %v38, 0.0
    %40 = vadd.xlane.f32.xlu0 %v39
    %v41 = vpop.xlane.xlu0 %40
    %v42 = vmul.f32 %v31, %v15
    %v43 = vsel %vm32, %v42, 0.0
    %44 = vadd.xlane.f32.xlu0 %v43
    %v45 = vpop.xlane.xlu0 %44
    %v47 = vperm.slane %v17, 0
    %v49 = vmul.f32 %v31, %v47
    %v50 = vsel %vm32, %v49, 0.0
    %51 = vadd.xlane.f32.xlu0 %v50
    %v52 = vpop.xlane.xlu0 %51
    %v53 = vsub.f32 %v45, %v35
    %v54 = vlog2.pop %v41
    %v55 = vmul.f32 %v54, 0.6931472
    %v56 = vsub.f32 %v53, %v55
    %v57 = vmul.f32 %v56, 1.442695
    %v58 = vpow.pop %v57
    %v59 = vsub.f32 0.0, %v52
    %v60 = vmul.f32 %v59, %v56
    %v61 = vsub.f32 1.0, %v58
    %v62 = vmul.f32 %v61, %v61
    %v63 = vmul.f32 %v60, %v62
    %v64 = vsel %vm23, %v63, 0.0
    %vm65 = vcmask 7168
    %v66 = vsel %vm65, %v64, 0.0
    %67 = vadd.xlane.f32.xlu0 %v66
    %v68 = vpop.xlane.xlu0 %67
    %v69 = vrot.slane %v68, 4
    %v70 = vadd.f32 %v68, %v69
    %v71 = vrot.slane %v70, 2
    %v72 = vadd.f32 %v70, %v71
    %v73 = vrot.slane %v72, 1
    %v74 = vadd.f32 %v72, %v73
    %s75 = vtos %v74
    %v76 = vstv %s75
    %vm77 = vcmask 0
    %78 = vst.msk [vmem:[#allocation2] sm:$0x1] %vm77, %v76
    // Predicated region
    $region14: #{tpu_custom_call.1} parent=1 // pred_check
      _
    $region15: #{tpu_custom_call.1} parent=1 // pred_check_branch
      %80 = sbr.rel (0) target = $region17
    $region16: #{tpu_custom_call.1} parent=1 // pred_region
      %82 = vsyncadd [#allocation3], 0
      %s84 = sshll.u32 [#allocation2], 4
      %s85 = int_to_ptr.vmem [resolvable:$true] %s84
      %s86 = sshll.u32 %s3, 4
      %s87 = int_to_ptr.hbm [resolvable:$true] %s86
      %89 = dma.vmem_to_hbm [thread:$0]  %s85, 16, %s87, [#allocation3]
    $region17: #{tpu_custom_call.1} parent=1 // pred_fallthru
      _
    // Predicated region
    $region18: #{tpu_custom_call.1} parent=1 // pred_check
      _
    $region19: #{tpu_custom_call.1} parent=1 // pred_check_branch
      %91 = sbr.rel (0) target = $region21
    $region20: #{tpu_custom_call.1} parent=1 // pred_region
      %93 = dma.done [#allocation3], 16
    $region21: #{tpu_custom_call.1} parent=1 // pred_fallthru
      _
    %94 = vsyncpa [#allocation3], 1

</llo_original>
